<compile_context>
chip_gen: v7x
topology: tpu7x:2x2x1
jax: 0.10.0
libtpu: 0.0.40
codegen_flags: <defaults>
</compile_context>

<pallas_src>
import jax
import jax.numpy as jnp
from jax.experimental import pallas as pl
from jax.experimental.pallas import tpu as pltpu

LANES = 128      # vreg lane width
TM_MAX = 4096    # max block rows -> 2 MiB per f32 input block


def _num_cores():
    """2-way outer grid split only on 2-TensorCore chips (v7x); 1 elsewhere."""
    try:
        kind = (jax.devices()[0].device_kind or "").lower()
    except Exception:
        return 1
    return 2 if "v7" in kind else 1


def _dice_bce_kernel(n_ref, x_ref, t_ref, out_ref,
                     inter_acc, p_acc, t_acc, bce_acc):
    o = pl.program_id(0)              # parallel axis (per-core partial sums)
    k = pl.program_id(1)              # sequential reduction axis
    steps = pl.num_programs(1)

    tm, lanes = x_ref.shape
    block_elems = tm * lanes
    ib = o * steps + k                # logical block index over the row slab
    start = ib * block_elems          # first flat element index of this block
    n = n_ref[0]                      # number of valid elements (int32)
    # NOTE: int32 flat-index math; fine for < 2**31 elements.

    @pl.when(k == 0)
    def _init():
        inter_acc[...] = jnp.zeros_like(inter_acc)
        p_acc[...] = jnp.zeros_like(p_acc)
        t_acc[...] = jnp.zeros_like(t_acc)
        bce_acc[...] = jnp.zeros_like(bce_acc)

    x = x_ref[...].astype(jnp.float32)
    t = t_ref[...].astype(jnp.float32)

    def red8(v):
        # (tm, 128) -> (tm//8, 8, 128): tile-aligned split of the sublane dim,
        # reduced with plain vreg adds (no cross-lane / XLU work).
        return jnp.sum(v.reshape(tm // 8, 8, lanes), axis=0)

    def accumulate(mask):
        xv, tv = x, t
        if mask is not None:
            xv = jnp.where(mask, xv, 0.0)   # also kills garbage/NaN in padding
            tv = jnp.where(mask, tv, 0.0)
        p = jax.nn.sigmoid(xv)
        log_p = jnp.log(p)                  # p == 0 -> -inf (clamped below)
        # log(1-p) = log(sigmoid(-x)) = log(sigmoid(x)) - x  (saves one log)
        log_1mp = log_p - xv
        # Match F.binary_cross_entropy when f32 sigmoid saturates:
        log_1mp = jnp.where(p >= 1.0, -100.0, log_1mp)      # log(0) -> clamp
        log_1mp = jnp.where(1.0 - p >= 1.0, 0.0, log_1mp)   # log(1) -> 0
        log_p = jnp.maximum(log_p, -100.0)
        log_1mp = jnp.maximum(log_1mp, -100.0)
        bce = -(tv * log_p + (1.0 - tv) * log_1mp)
        if mask is not None:
            p = jnp.where(mask, p, 0.0)
            bce = jnp.where(mask, bce, 0.0)
        inter_acc[...] += red8(p * tv)
        p_acc[...] += red8(p)
        t_acc[...] += red8(tv)
        bce_acc[...] += red8(bce)

    is_full = start + block_elems <= n

    @pl.when(is_full)
    def _full_block():
        accumulate(None)                    # hot path: no masking work

    @pl.when(jnp.logical_not(is_full))
    def _partial_block():
        row = jax.lax.broadcasted_iota(jnp.int32, (tm, lanes), 0)
        col = jax.lax.broadcasted_iota(jnp.int32, (tm, lanes), 1)
        accumulate(start + row * lanes + col < n)

    @pl.when(k == steps - 1)
    def _finalize():
        out_ref[0:1, :] = jnp.sum(inter_acc[...], axis=0, keepdims=True)
        out_ref[1:2, :] = jnp.sum(p_acc[...], axis=0, keepdims=True)
        out_ref[2:3, :] = jnp.sum(t_acc[...], axis=0, keepdims=True)
        out_ref[3:4, :] = jnp.sum(bce_acc[...], axis=0, keepdims=True)


def _partial_sums_pallas(x2, t2, n_valid, ncores):
    """Per-lane partial sums of {p*t, p, t, bce} over a (rows, 128) slab."""
    rows = x2.shape[0]
    tm = min(TM_MAX, ((rows + 7) // 8) * 8)
    num_blocks = pl.cdiv(rows, tm)
    spc = pl.cdiv(num_blocks, ncores)       # grid steps per outer index

    def in_map(o, k, n_s):
        # Clamp so fully-out-of-range blocks re-read the last real block;
        # their contribution is masked to zero inside the kernel (the mask is
        # computed from the *logical* block index, not this clamped one).
        return (jnp.minimum(o * spc + k, num_blocks - 1), 0)

    in_spec = pl.BlockSpec((tm, LANES), in_map)

    partial = pl.pallas_call(
        _dice_bce_kernel,
        out_shape=jax.ShapeDtypeStruct((ncores, 4, LANES), jnp.float32),
        grid_spec=pltpu.PrefetchScalarGridSpec(
            num_scalar_prefetch=1,
            grid=(ncores, spc),
            in_specs=[in_spec, in_spec],
            out_specs=pl.BlockSpec((None, 4, LANES), lambda o, k, n_s: (o, 0, 0)),
            scratch_shapes=[pltpu.VMEM((8, LANES), jnp.float32)] * 4,
        ),
        compiler_params=pltpu.CompilerParams(
            dimension_semantics=("parallel", "arbitrary"),
            vmem_limit_bytes=32 << 20),
    )(jnp.array([n_valid], dtype=jnp.int32), x2, t2)

    return (jnp.sum(partial[:, 0, :]), jnp.sum(partial[:, 1, :]),
            jnp.sum(partial[:, 2, :]), jnp.sum(partial[:, 3, :]))


def dice_bce_loss(inputs, targets, smooth=1e-6):
    """JAX/Pallas equivalent of DiceBCELoss.forward."""
    n = inputs.size
    x = inputs.reshape(-1)                  # native dtype; cast in-kernel
    t = targets.reshape(-1)

    n_main = (n // LANES) * LANES           # 128-aligned prefix handled by kernel
    tail_len = n - n_main

    inter = jnp.float32(0.0)
    p_sum = jnp.float32(0.0)
    t_sum = jnp.float32(0.0)
    bce_sum = jnp.float32(0.0)

    if n_main:
        x_main = x if tail_len == 0 else jax.lax.slice(x, (0,), (n_main,))
        t_main = t if tail_len == 0 else jax.lax.slice(t, (0,), (n_main,))
        x2 = x_main.reshape(n_main // LANES, LANES)
        t2 = t_main.reshape(n_main // LANES, LANES)
        inter, p_sum, t_sum, bce_sum = _partial_sums_pallas(
            x2, t2, n_main, _num_cores())

    if tail_len:
        # <=127 leftover elements: fold in with plain JAX (no whole-array pad).
        xt = x[n_main:].astype(jnp.float32)
        tt = t[n_main:].astype(jnp.float32)
        pt = jax.nn.sigmoid(xt)
        log_p = jnp.maximum(jnp.log(pt), -100.0)
        log_1mp = jnp.maximum(jnp.log(1.0 - pt), -100.0)
        inter = inter + jnp.sum(pt * tt)
        p_sum = p_sum + jnp.sum(pt)
        t_sum = t_sum + jnp.sum(tt)
        bce_sum = bce_sum + jnp.sum(-(tt * log_p + (1.0 - tt) * log_1mp))

    dice_loss = 1.0 - (2.0 * inter + smooth) / (p_sum + t_sum + smooth)
    bce_mean = bce_sum / n   # n == 0 -> NaN, same as torch mean of empty tensor
    return (bce_mean + dice_loss) / 2.0


if __name__ == "__main__":
    key = jax.random.PRNGKey(0)
    k1, k2 = jax.random.split(key)
    # NCHW, same convention as the PyTorch module's typical usage.
    x = jax.random.normal(k1, (2, 4, 16, 16), dtype=jnp.float32)
    t = (jax.random.uniform(k2, (2, 4, 16, 16)) > 0.5).astype(jnp.float32)

    out = dice_bce_loss(x, t)
    out = jax.block_until_ready(out)

    # Pure-JAX reference mirroring the PyTorch module.
    p = jax.nn.sigmoid(x).reshape(-1)
    tf = t.reshape(-1)
    inter = jnp.sum(p * tf)
    dice = 1.0 - (2.0 * inter + 1e-6) / (jnp.sum(p) + jnp.sum(tf) + 1e-6)
    bce = jnp.mean(-(tf * jnp.maximum(jnp.log(p), -100.0)
                     + (1.0 - tf) * jnp.maximum(jnp.log(1.0 - p), -100.0)))
    ref = (bce + dice) / 2.0
    assert abs(float(out) - float(ref)) < 5e-5, (float(out), float(ref))

    print("KERNEL_OK")
</pallas_src>

<mosaic_0001>
module attributes {stable_mosaic.version = 11 : i64} {
  func.func @_dice_bce_kernel(%arg0: i32, %arg1: i32, %arg2: memref<1xi32, #tpu.memory_space<smem>>, %arg3: memref<16x128xf32, #tpu.memory_space<vmem>>, %arg4: memref<16x128xf32, #tpu.memory_space<vmem>>, %arg5: memref<1x4x128xf32, #tpu.memory_space<vmem>>, %arg6: memref<8x128xf32, #tpu.memory_space<vmem>>, %arg7: memref<8x128xf32, #tpu.memory_space<vmem>>, %arg8: memref<8x128xf32, #tpu.memory_space<vmem>>, %arg9: memref<8x128xf32, #tpu.memory_space<vmem>>) attributes {dimension_semantics = [#tpu.dimension_semantics<parallel>, #tpu.dimension_semantics<arbitrary>], iteration_bounds = array<i64: 1, 1>, scalar_prefetch = 1 : i64, scratch_operands = 4 : i64, tpu.core_type = #tpu.core_type<tc>, window_params = [{transform_indices = @transform_0, window_bounds = array<i64: 16, 128>}, {transform_indices = @transform_1, window_bounds = array<i64: 16, 128>}, {transform_indices = @transform_2, window_bounds = array<i64: 1, 4, 128>}]} {
    %c1_i32 = arith.constant 1 : i32
    %0 = arith.muli %arg0, %c1_i32 : i32
    %1 = arith.addi %0, %arg1 : i32
    %c2048_i32 = arith.constant 2048 : i32
    %2 = arith.muli %1, %c2048_i32 : i32
    %c0 = arith.constant 0 : index
    %3 = memref.load %arg2[%c0] : memref<1xi32, #tpu.memory_space<smem>>
    %c0_i32 = arith.constant 0 : i32
    %4 = arith.cmpi eq, %arg1, %c0_i32 : i32
    %5 = arith.extui %4 : i1 to i32
    %c0_i32_0 = arith.constant 0 : i32
    %6 = arith.cmpi ne, %5, %c0_i32_0 : i32
    scf.if %6 {
      %cst = arith.constant 0.000000e+00 : f32
      %19 = vector.broadcast %cst : f32 to vector<8x128xf32>
      %c0_10 = arith.constant 0 : index
      %c0_11 = arith.constant 0 : index
      %20 = vector.load %arg6[%c0_10, %c0_11] : memref<8x128xf32, #tpu.memory_space<vmem>>, vector<8x128xf32>
      tpu.vector_store %arg6[%c0_10, %c0_11], %19 {strides = array<i32>} : memref<8x128xf32, #tpu.memory_space<vmem>>, vector<8x128xf32>,
      %cst_12 = arith.constant 0.000000e+00 : f32
      %21 = vector.broadcast %cst_12 : f32 to vector<8x128xf32>
      %c0_13 = arith.constant 0 : index
      %c0_14 = arith.constant 0 : index
      %22 = vector.load %arg7[%c0_13, %c0_14] : memref<8x128xf32, #tpu.memory_space<vmem>>, vector<8x128xf32>
      tpu.vector_store %arg7[%c0_13, %c0_14], %21 {strides = array<i32>} : memref<8x128xf32, #tpu.memory_space<vmem>>, vector<8x128xf32>,
      %cst_15 = arith.constant 0.000000e+00 : f32
      %23 = vector.broadcast %cst_15 : f32 to vector<8x128xf32>
      %c0_16 = arith.constant 0 : index
      %c0_17 = arith.constant 0 : index
      %24 = vector.load %arg8[%c0_16, %c0_17] : memref<8x128xf32, #tpu.memory_space<vmem>>, vector<8x128xf32>
      tpu.vector_store %arg8[%c0_16, %c0_17], %23 {strides = array<i32>} : memref<8x128xf32, #tpu.memory_space<vmem>>, vector<8x128xf32>,
      %cst_18 = arith.constant 0.000000e+00 : f32
      %25 = vector.broadcast %cst_18 : f32 to vector<8x128xf32>
      %c0_19 = arith.constant 0 : index
      %c0_20 = arith.constant 0 : index
      %26 = vector.load %arg9[%c0_19, %c0_20] : memref<8x128xf32, #tpu.memory_space<vmem>>, vector<8x128xf32>
      tpu.vector_store %arg9[%c0_19, %c0_20], %25 {strides = array<i32>} : memref<8x128xf32, #tpu.memory_space<vmem>>, vector<8x128xf32>,
    } else {
    }
    %c0_1 = arith.constant 0 : index
    %c0_2 = arith.constant 0 : index
    %7 = vector.load %arg3[%c0_1, %c0_2] : memref<16x128xf32, #tpu.memory_space<vmem>>, vector<16x128xf32>
    %c0_3 = arith.constant 0 : index
    %c0_4 = arith.constant 0 : index
    %8 = vector.load %arg4[%c0_3, %c0_4] : memref<16x128xf32, #tpu.memory_space<vmem>>, vector<16x128xf32>
    %c2048_i32_5 = arith.constant 2048 : i32
    %9 = arith.addi %2, %c2048_i32_5 : i32
    %10 = arith.cmpi sle, %9, %3 : i32
    %11 = arith.extui %10 : i1 to i32
    %c0_i32_6 = arith.constant 0 : i32
    %12 = arith.cmpi ne, %11, %c0_i32_6 : i32
    scf.if %12 {
      %19 = arith.negf %7 : vector<16x128xf32>
      %20 = math.exp %19 : vector<16x128xf32>
      %cst = arith.constant 1.000000e+00 : f32
      %21 = vector.broadcast %cst : f32 to vector<16x128xf32>
      %22 = arith.addf %21, %20 : vector<16x128xf32>
      %23 = arith.divf %21, %22 : vector<16x128xf32>
      %24 = math.log %23 : vector<16x128xf32>
      %25 = arith.subf %24, %7 : vector<16x128xf32>
      %cst_10 = arith.constant 1.000000e+00 : f32
      %26 = vector.broadcast %cst_10 : f32 to vector<16x128xf32>
      %27 = arith.cmpf oge, %23, %26 : vector<16x128xf32>
      %cst_11 = arith.constant -1.000000e+02 : f32
      %28 = vector.broadcast %cst_11 : f32 to vector<16x128xf32>
      %29 = arith.select %27, %28, %25 : vector<16x128xi1>, vector<16x128xf32>
      %cst_12 = arith.constant 1.000000e+00 : f32
      %30 = vector.broadcast %cst_12 : f32 to vector<16x128xf32>
      %31 = arith.subf %30, %23 : vector<16x128xf32>
      %cst_13 = arith.constant 1.000000e+00 : f32
      %32 = vector.broadcast %cst_13 : f32 to vector<16x128xf32>
      %33 = arith.cmpf oge, %31, %32 : vector<16x128xf32>
      %cst_14 = arith.constant 0.000000e+00 : f32
      %34 = vector.broadcast %cst_14 : f32 to vector<16x128xf32>
      %35 = arith.select %33, %34, %29 : vector<16x128xi1>, vector<16x128xf32>
      %cst_15 = arith.constant -1.000000e+02 : f32
      %36 = vector.broadcast %cst_15 : f32 to vector<16x128xf32>
      %37 = arith.maximumf %24, %36 : vector<16x128xf32>
      %cst_16 = arith.constant -1.000000e+02 : f32
      %38 = vector.broadcast %cst_16 : f32 to vector<16x128xf32>
      %39 = arith.maximumf %35, %38 : vector<16x128xf32>
      %40 = arith.mulf %8, %37 : vector<16x128xf32>
      %cst_17 = arith.constant 1.000000e+00 : f32
      %41 = vector.broadcast %cst_17 : f32 to vector<16x128xf32>
      %42 = arith.subf %41, %8 : vector<16x128xf32>
      %43 = arith.mulf %42, %39 : vector<16x128xf32>
      %44 = arith.addf %40, %43 : vector<16x128xf32>
      %cst_18 = arith.constant 0.000000e+00 : f32
      %45 = vector.broadcast %cst_18 : f32 to vector<16x128xf32>
      %46 = arith.subf %45, %44 : vector<16x128xf32>
      %c0_19 = arith.constant 0 : index
      %c0_20 = arith.constant 0 : index
      %47 = vector.load %arg6[%c0_19, %c0_20] : memref<8x128xf32, #tpu.memory_space<vmem>>, vector<8x128xf32>
      %48 = arith.mulf %23, %8 : vector<16x128xf32>
      %49 = vector.shape_cast %48 : vector<16x128xf32> to vector<2x8x128xf32>
      %cst_21 = arith.constant dense<0.000000e+00> : vector<8x128xf32>
      %50 = vector.multi_reduction <add>, %49, %cst_21 [0] : vector<2x8x128xf32> to vector<8x128xf32>
      %51 = arith.addf %47, %50 : vector<8x128xf32>
      %c0_22 = arith.constant 0 : index
      %c0_23 = arith.constant 0 : index
      %52 = vector.load %arg6[%c0_22, %c0_23] : memref<8x128xf32, #tpu.memory_space<vmem>>, vector<8x128xf32>
      tpu.vector_store %arg6[%c0_22, %c0_23], %51 {strides = array<i32>} : memref<8x128xf32, #tpu.memory_space<vmem>>, vector<8x128xf32>,
      %c0_24 = arith.constant 0 : index
      %c0_25 = arith.constant 0 : index
      %53 = vector.load %arg7[%c0_24, %c0_25] : memref<8x128xf32, #tpu.memory_space<vmem>>, vector<8x128xf32>
      %54 = vector.shape_cast %23 : vector<16x128xf32> to vector<2x8x128xf32>
      %cst_26 = arith.constant dense<0.000000e+00> : vector<8x128xf32>
      %55 = vector.multi_reduction <add>, %54, %cst_26 [0] : vector<2x8x128xf32> to vector<8x128xf32>
      %56 = arith.addf %53, %55 : vector<8x128xf32>
      %c0_27 = arith.constant 0 : index
      %c0_28 = arith.constant 0 : index
      %57 = vector.load %arg7[%c0_27, %c0_28] : memref<8x128xf32, #tpu.memory_space<vmem>>, vector<8x128xf32>
      tpu.vector_store %arg7[%c0_27, %c0_28], %56 {strides = array<i32>} : memref<8x128xf32, #tpu.memory_space<vmem>>, vector<8x128xf32>,
      %c0_29 = arith.constant 0 : index
      %c0_30 = arith.constant 0 : index
      %58 = vector.load %arg8[%c0_29, %c0_30] : memref<8x128xf32, #tpu.memory_space<vmem>>, vector<8x128xf32>
      %59 = vector.shape_cast %8 : vector<16x128xf32> to vector<2x8x128xf32>
      %cst_31 = arith.constant dense<0.000000e+00> : vector<8x128xf32>
      %60 = vector.multi_reduction <add>, %59, %cst_31 [0] : vector<2x8x128xf32> to vector<8x128xf32>
      %61 = arith.addf %58, %60 : vector<8x128xf32>
      %c0_32 = arith.constant 0 : index
      %c0_33 = arith.constant 0 : index
      %62 = vector.load %arg8[%c0_32, %c0_33] : memref<8x128xf32, #tpu.memory_space<vmem>>, vector<8x128xf32>
      tpu.vector_store %arg8[%c0_32, %c0_33], %61 {strides = array<i32>} : memref<8x128xf32, #tpu.memory_space<vmem>>, vector<8x128xf32>,
      %c0_34 = arith.constant 0 : index
      %c0_35 = arith.constant 0 : index
      %63 = vector.load %arg9[%c0_34, %c0_35] : memref<8x128xf32, #tpu.memory_space<vmem>>, vector<8x128xf32>
      %64 = vector.shape_cast %46 : vector<16x128xf32> to vector<2x8x128xf32>
      %cst_36 = arith.constant dense<0.000000e+00> : vector<8x128xf32>
      %65 = vector.multi_reduction <add>, %64, %cst_36 [0] : vector<2x8x128xf32> to vector<8x128xf32>
      %66 = arith.addf %63, %65 : vector<8x128xf32>
      %c0_37 = arith.constant 0 : index
      %c0_38 = arith.constant 0 : index
      %67 = vector.load %arg9[%c0_37, %c0_38] : memref<8x128xf32, #tpu.memory_space<vmem>>, vector<8x128xf32>
      tpu.vector_store %arg9[%c0_37, %c0_38], %66 {strides = array<i32>} : memref<8x128xf32, #tpu.memory_space<vmem>>, vector<8x128xf32>,
    } else {
    }
    %true = arith.constant true
    %13 = arith.xori %10, %true : i1
    %14 = arith.extui %13 : i1 to i32
    %c0_i32_7 = arith.constant 0 : i32
    %15 = arith.cmpi ne, %14, %c0_i32_7 : i32
    scf.if %15 {
      %19 = tpu.iota {dimensions = array<i32: 0>} : vector<16x128xi32>
      %20 = tpu.iota {dimensions = array<i32: 1>} : vector<16x128xi32>
      %c128_i32 = arith.constant 128 : i32
      %21 = vector.broadcast %c128_i32 : i32 to vector<16x128xi32>
      %22 = arith.muli %19, %21 : vector<16x128xi32>
      %23 = vector.broadcast %2 : i32 to vector<16x128xi32>
      %24 = arith.addi %23, %22 : vector<16x128xi32>
      %25 = arith.addi %24, %20 : vector<16x128xi32>
      %26 = vector.broadcast %3 : i32 to vector<16x128xi32>
      %27 = arith.cmpi slt, %25, %26 : vector<16x128xi32>
      %cst = arith.constant 0.000000e+00 : f32
      %28 = vector.broadcast %cst : f32 to vector<16x128xf32>
      %29 = arith.select %27, %7, %28 : vector<16x128xi1>, vector<16x128xf32>
      %cst_10 = arith.constant 0.000000e+00 : f32
      %30 = vector.broadcast %cst_10 : f32 to vector<16x128xf32>
      %31 = arith.select %27, %8, %30 : vector<16x128xi1>, vector<16x128xf32>
      %32 = arith.negf %29 : vector<16x128xf32>
      %33 = math.exp %32 : vector<16x128xf32>
      %cst_11 = arith.constant 1.000000e+00 : f32
      %34 = vector.broadcast %cst_11 : f32 to vector<16x128xf32>
      %35 = arith.addf %34, %33 : vector<16x128xf32>
      %36 = arith.divf %34, %35 : vector<16x128xf32>
      %37 = math.log %36 : vector<16x128xf32>
      %38 = arith.subf %37, %29 : vector<16x128xf32>
      %cst_12 = arith.constant 1.000000e+00 : f32
      %39 = vector.broadcast %cst_12 : f32 to vector<16x128xf32>
      %40 = arith.cmpf oge, %36, %39 : vector<16x128xf32>
      %cst_13 = arith.constant -1.000000e+02 : f32
      %41 = vector.broadcast %cst_13 : f32 to vector<16x128xf32>
      %42 = arith.select %40, %41, %38 : vector<16x128xi1>, vector<16x128xf32>
      %cst_14 = arith.constant 1.000000e+00 : f32
      %43 = vector.broadcast %cst_14 : f32 to vector<16x128xf32>
      %44 = arith.subf %43, %36 : vector<16x128xf32>
      %cst_15 = arith.constant 1.000000e+00 : f32
      %45 = vector.broadcast %cst_15 : f32 to vector<16x128xf32>
      %46 = arith.cmpf oge, %44, %45 : vector<16x128xf32>
      %cst_16 = arith.constant 0.000000e+00 : f32
      %47 = vector.broadcast %cst_16 : f32 to vector<16x128xf32>
      %48 = arith.select %46, %47, %42 : vector<16x128xi1>, vector<16x128xf32>
      %cst_17 = arith.constant -1.000000e+02 : f32
      %49 = vector.broadcast %cst_17 : f32 to vector<16x128xf32>
      %50 = arith.maximumf %37, %49 : vector<16x128xf32>
      %cst_18 = arith.constant -1.000000e+02 : f32
      %51 = vector.broadcast %cst_18 : f32 to vector<16x128xf32>
      %52 = arith.maximumf %48, %51 : vector<16x128xf32>
      %53 = arith.mulf %31, %50 : vector<16x128xf32>
      %cst_19 = arith.constant 1.000000e+00 : f32
      %54 = vector.broadcast %cst_19 : f32 to vector<16x128xf32>
      %55 = arith.subf %54, %31 : vector<16x128xf32>
      %56 = arith.mulf %55, %52 : vector<16x128xf32>
      %57 = arith.addf %53, %56 : vector<16x128xf32>
      %cst_20 = arith.constant 0.000000e+00 : f32
      %58 = vector.broadcast %cst_20 : f32 to vector<16x128xf32>
      %59 = arith.subf %58, %57 : vector<16x128xf32>
      %cst_21 = arith.constant 0.000000e+00 : f32
      %60 = vector.broadcast %cst_21 : f32 to vector<16x128xf32>
      %61 = arith.select %27, %36, %60 : vector<16x128xi1>, vector<16x128xf32>
      %cst_22 = arith.constant 0.000000e+00 : f32
      %62 = vector.broadcast %cst_22 : f32 to vector<16x128xf32>
      %63 = arith.select %27, %59, %62 : vector<16x128xi1>, vector<16x128xf32>
      %c0_23 = arith.constant 0 : index
      %c0_24 = arith.constant 0 : index
      %64 = vector.load %arg6[%c0_23, %c0_24] : memref<8x128xf32, #tpu.memory_space<vmem>>, vector<8x128xf32>
      %65 = arith.mulf %61, %31 : vector<16x128xf32>
      %66 = vector.shape_cast %65 : vector<16x128xf32> to vector<2x8x128xf32>
      %cst_25 = arith.constant dense<0.000000e+00> : vector<8x128xf32>
      %67 = vector.multi_reduction <add>, %66, %cst_25 [0] : vector<2x8x128xf32> to vector<8x128xf32>
      %68 = arith.addf %64, %67 : vector<8x128xf32>
      %c0_26 = arith.constant 0 : index
      %c0_27 = arith.constant 0 : index
      %69 = vector.load %arg6[%c0_26, %c0_27] : memref<8x128xf32, #tpu.memory_space<vmem>>, vector<8x128xf32>
      tpu.vector_store %arg6[%c0_26, %c0_27], %68 {strides = array<i32>} : memref<8x128xf32, #tpu.memory_space<vmem>>, vector<8x128xf32>,
      %c0_28 = arith.constant 0 : index
      %c0_29 = arith.constant 0 : index
      %70 = vector.load %arg7[%c0_28, %c0_29] : memref<8x128xf32, #tpu.memory_space<vmem>>, vector<8x128xf32>
      %71 = vector.shape_cast %61 : vector<16x128xf32> to vector<2x8x128xf32>
      %cst_30 = arith.constant dense<0.000000e+00> : vector<8x128xf32>
      %72 = vector.multi_reduction <add>, %71, %cst_30 [0] : vector<2x8x128xf32> to vector<8x128xf32>
      %73 = arith.addf %70, %72 : vector<8x128xf32>
      %c0_31 = arith.constant 0 : index
      %c0_32 = arith.constant 0 : index
      %74 = vector.load %arg7[%c0_31, %c0_32] : memref<8x128xf32, #tpu.memory_space<vmem>>, vector<8x128xf32>
      tpu.vector_store %arg7[%c0_31, %c0_32], %73 {strides = array<i32>} : memref<8x128xf32, #tpu.memory_space<vmem>>, vector<8x128xf32>,
      %c0_33 = arith.constant 0 : index
      %c0_34 = arith.constant 0 : index
      %75 = vector.load %arg8[%c0_33, %c0_34] : memref<8x128xf32, #tpu.memory_space<vmem>>, vector<8x128xf32>
      %76 = vector.shape_cast %31 : vector<16x128xf32> to vector<2x8x128xf32>
      %cst_35 = arith.constant dense<0.000000e+00> : vector<8x128xf32>
      %77 = vector.multi_reduction <add>, %76, %cst_35 [0] : vector<2x8x128xf32> to vector<8x128xf32>
      %78 = arith.addf %75, %77 : vector<8x128xf32>
      %c0_36 = arith.constant 0 : index
      %c0_37 = arith.constant 0 : index
      %79 = vector.load %arg8[%c0_36, %c0_37] : memref<8x128xf32, #tpu.memory_space<vmem>>, vector<8x128xf32>
      tpu.vector_store %arg8[%c0_36, %c0_37], %78 {strides = array<i32>} : memref<8x128xf32, #tpu.memory_space<vmem>>, vector<8x128xf32>,
      %c0_38 = arith.constant 0 : index
      %c0_39 = arith.constant 0 : index
      %80 = vector.load %arg9[%c0_38, %c0_39] : memref<8x128xf32, #tpu.memory_space<vmem>>, vector<8x128xf32>
      %81 = vector.shape_cast %63 : vector<16x128xf32> to vector<2x8x128xf32>
      %cst_40 = arith.constant dense<0.000000e+00> : vector<8x128xf32>
      %82 = vector.multi_reduction <add>, %81, %cst_40 [0] : vector<2x8x128xf32> to vector<8x128xf32>
      %83 = arith.addf %80, %82 : vector<8x128xf32>
      %c0_41 = arith.constant 0 : index
      %c0_42 = arith.constant 0 : index
      %84 = vector.load %arg9[%c0_41, %c0_42] : memref<8x128xf32, #tpu.memory_space<vmem>>, vector<8x128xf32>
      tpu.vector_store %arg9[%c0_41, %c0_42], %83 {strides = array<i32>} : memref<8x128xf32, #tpu.memory_space<vmem>>, vector<8x128xf32>,
    } else {
    }
    %c0_i32_8 = arith.constant 0 : i32
    %16 = arith.cmpi eq, %arg1, %c0_i32_8 : i32
    %17 = arith.extui %16 : i1 to i32
    %c0_i32_9 = arith.constant 0 : i32
    %18 = arith.cmpi ne, %17, %c0_i32_9 : i32
    scf.if %18 {
      %c0_10 = arith.constant 0 : index
      %c0_11 = arith.constant 0 : index
      %19 = vector.load %arg6[%c0_10, %c0_11] : memref<8x128xf32, #tpu.memory_space<vmem>>, vector<8x128xf32>
      %cst = arith.constant dense<0.000000e+00> : vector<128xf32>
      %20 = vector.multi_reduction <add>, %19, %cst [0] : vector<8x128xf32> to vector<128xf32>
      %21 = vector.shape_cast %20 : vector<128xf32> to vector<1x128xf32>
      %c0_12 = arith.constant 0 : index
      %c0_13 = arith.constant 0 : index
      %c0_14 = arith.constant 0 : index
      %22 = vector.load %arg5[%c0_12, %c0_13, %c0_14] : memref<1x4x128xf32, #tpu.memory_space<vmem>>, vector<1x1x128xf32>
      %23 = vector.shape_cast %22 : vector<1x1x128xf32> to vector<1x128xf32>
      %24 = vector.shape_cast %21 : vector<1x128xf32> to vector<1x1x128xf32>
      tpu.vector_store %arg5[%c0_12, %c0_13, %c0_14], %24 {strides = array<i32>} : memref<1x4x128xf32, #tpu.memory_space<vmem>>, vector<1x1x128xf32>,
      %c0_15 = arith.constant 0 : index
      %c0_16 = arith.constant 0 : index
      %25 = vector.load %arg7[%c0_15, %c0_16] : memref<8x128xf32, #tpu.memory_space<vmem>>, vector<8x128xf32>
      %cst_17 = arith.constant dense<0.000000e+00> : vector<128xf32>
      %26 = vector.multi_reduction <add>, %25, %cst_17 [0] : vector<8x128xf32> to vector<128xf32>
      %27 = vector.shape_cast %26 : vector<128xf32> to vector<1x128xf32>
      %c0_18 = arith.constant 0 : index
      %c1 = arith.constant 1 : index
      %c0_19 = arith.constant 0 : index
      %28 = vector.load %arg5[%c0_18, %c1, %c0_19] : memref<1x4x128xf32, #tpu.memory_space<vmem>>, vector<1x1x128xf32>
      %29 = vector.shape_cast %28 : vector<1x1x128xf32> to vector<1x128xf32>
      %30 = vector.shape_cast %27 : vector<1x128xf32> to vector<1x1x128xf32>
      tpu.vector_store %arg5[%c0_18, %c1, %c0_19], %30 {strides = array<i32>} : memref<1x4x128xf32, #tpu.memory_space<vmem>>, vector<1x1x128xf32>,
      %c0_20 = arith.constant 0 : index
      %c0_21 = arith.constant 0 : index
      %31 = vector.load %arg8[%c0_20, %c0_21] : memref<8x128xf32, #tpu.memory_space<vmem>>, vector<8x128xf32>
      %cst_22 = arith.constant dense<0.000000e+00> : vector<128xf32>
      %32 = vector.multi_reduction <add>, %31, %cst_22 [0] : vector<8x128xf32> to vector<128xf32>
      %33 = vector.shape_cast %32 : vector<128xf32> to vector<1x128xf32>
      %c0_23 = arith.constant 0 : index
      %c2 = arith.constant 2 : index
      %c0_24 = arith.constant 0 : index
      %34 = vector.load %arg5[%c0_23, %c2, %c0_24] : memref<1x4x128xf32, #tpu.memory_space<vmem>>, vector<1x1x128xf32>
      %35 = vector.shape_cast %34 : vector<1x1x128xf32> to vector<1x128xf32>
      %36 = vector.shape_cast %33 : vector<1x128xf32> to vector<1x1x128xf32>
      tpu.vector_store %arg5[%c0_23, %c2, %c0_24], %36 {strides = array<i32>} : memref<1x4x128xf32, #tpu.memory_space<vmem>>, vector<1x1x128xf32>,
      %c0_25 = arith.constant 0 : index
      %c0_26 = arith.constant 0 : index
      %37 = vector.load %arg9[%c0_25, %c0_26] : memref<8x128xf32, #tpu.memory_space<vmem>>, vector<8x128xf32>
      %cst_27 = arith.constant dense<0.000000e+00> : vector<128xf32>
      %38 = vector.multi_reduction <add>, %37, %cst_27 [0] : vector<8x128xf32> to vector<128xf32>
      %39 = vector.shape_cast %38 : vector<128xf32> to vector<1x128xf32>
      %c0_28 = arith.constant 0 : index
      %c3 = arith.constant 3 : index
      %c0_29 = arith.constant 0 : index
      %40 = vector.load %arg5[%c0_28, %c3, %c0_29] : memref<1x4x128xf32, #tpu.memory_space<vmem>>, vector<1x1x128xf32>
      %41 = vector.shape_cast %40 : vector<1x1x128xf32> to vector<1x128xf32>
      %42 = vector.shape_cast %39 : vector<1x128xf32> to vector<1x1x128xf32>
      tpu.vector_store %arg5[%c0_28, %c3, %c0_29], %42 {strides = array<i32>} : memref<1x4x128xf32, #tpu.memory_space<vmem>>, vector<1x1x128xf32>,
    } else {
    }
    return
  }
  func.func @transform_0(%arg0: i32, %arg1: i32, %arg2: memref<1xi32, #tpu.memory_space<smem>>) -> (i32, i32) {
    %c1_i32 = arith.constant 1 : i32
    %0 = arith.muli %arg0, %c1_i32 : i32
    %1 = arith.addi %0, %arg1 : i32
    %c0_i32 = arith.constant 0 : i32
    %2 = arith.minsi %1, %c0_i32 : i32
    %c0_i32_0 = arith.constant 0 : i32
    %c0_i32_1 = arith.constant 0 : i32
    return %2, %c0_i32_0 : i32, i32
  }
  func.func @transform_1(%arg0: i32, %arg1: i32, %arg2: memref<1xi32, #tpu.memory_space<smem>>) -> (i32, i32) {
    %c1_i32 = arith.constant 1 : i32
    %0 = arith.muli %arg0, %c1_i32 : i32
    %1 = arith.addi %0, %arg1 : i32
    %c0_i32 = arith.constant 0 : i32
    %2 = arith.minsi %1, %c0_i32 : i32
    %c0_i32_0 = arith.constant 0 : i32
    %c0_i32_1 = arith.constant 0 : i32
    return %2, %c0_i32_0 : i32, i32
  }
  func.func @transform_2(%arg0: i32, %arg1: i32, %arg2: memref<1xi32, #tpu.memory_space<smem>>) -> (i32, i32, i32) {
    %c0_i32 = arith.constant 0 : i32
    %c0_i32_0 = arith.constant 0 : i32
    %c0_i32_1 = arith.constant 0 : i32
    return %arg0, %c0_i32, %c0_i32_0 : i32, i32, i32
  }
}

</mosaic_0001>

<llo_original>
// kernel: tpu_custom_call.1
$region0: #{tpu_custom_call.1}
  #allocation0 [shape = 'u32[]', space=smem, size = 0x4, offset = 0x4, fixed_abs, tag = 'smem constant byte address 0x4 - core index']
  #allocation1 [shape = 'u32[144,128]{1,0:T(1,128)}', space=vmem, size = 0x12000, scoped, tag = 'internal scratch']
  #allocation2 [shape = 'f32[8,128]{1,0:T(8,128)}', space=vmem, size = 0x1000, scoped, tag = 'scratch operand']
  #allocation3 [shape = 'f32[8,128]{1,0:T(8,128)}', space=vmem, size = 0x1000, scoped, tag = 'scratch operand']
  #allocation4 [shape = 'f32[8,128]{1,0:T(8,128)}', space=vmem, size = 0x1000, scoped, tag = 'scratch operand']
  #allocation5 [shape = 'f32[8,128]{1,0:T(8,128)}', space=vmem, size = 0x1000, scoped, tag = 'scratch operand']
  #allocation6 [shape = 's32[1]{0}', space=sflag, size = 0x4, scoped, tag = 'scoped memory for tpu_custom_call.1']
  #allocation7 [shape = 's32[1]{0:T(128)S(6)}', space=smem, size = 0x200, scoped, tag = 'prefetched SMEM operand 0']
  %s0 = inlined_call_operand.<no memory space> [shape: s32[1], index: 0, kind: input, shape index: {}]
  %s1 = inlined_call_operand.hbm [shape: f32[16,128], index: 1, kind: input, shape index: {}]
  %s2 = inlined_call_operand.hbm [shape: f32[16,128], index: 2, kind: input, shape index: {}]
  %s3 = inlined_call_operand.hbm [shape: f32[1,4,128], index: 3, kind: output, shape index: {}]
  %s4 = sld [smem:[#allocation0]]
  $region42: #{tpu_custom_call.1} parent=0
    _
  %s6 = ssub.s32 1, %s4
  %s7 = scalar_select 0, %s6, %s4
  %8 = sst [smem:[#allocation7]] %s0
  $region1: #{tpu_custom_call.1} parent=0
    #allocation8 [shape = 'u8[8192]{0}', space=vmem, size = 0x2000, scoped, tag = 'input window, operand 1, single buffered']
    #allocation9 [shape = 's32[1]{0}', space=sflag, size = 0x4, scoped, tag = 'scoped memory for tpu_custom_call.1']
    #allocation10 [shape = 's32[1]{0}', space=sflag, size = 0x4, scoped, tag = 'scoped memory for tpu_custom_call.1']
    #allocation11 [shape = 'u8[8192]{0}', space=vmem, size = 0x2000, scoped, tag = 'input window, operand 2, single buffered']
    #allocation12 [shape = 's32[1]{0}', space=sflag, size = 0x4, scoped, tag = 'scoped memory for tpu_custom_call.1']
    #allocation13 [shape = 'u8[2048]{0}', space=vmem, size = 0x800, scoped, tag = 'output window, operand 0, single buffered']
    %9 = vsyncpa [#allocation9], 0
    %10 = vsyncpa [#allocation12], 0
    %11 = vsyncpa [#allocation10], 0
    // Predicated region
    $region2: #{tpu_custom_call.1} parent=1 // pred_check
      _
    $region3: #{tpu_custom_call.1} parent=1 // pred_check_branch
      %13 = sbr.rel (0) target = $region5
    $region4: #{tpu_custom_call.1} parent=1 // pred_region
      %s14 = sadd.s32 0, 0
      %p15 = scmp.lt.s32.totalorder %s14, 0
      %s16 = scalar_select %p15, %s14, 0
      %s17 = smul.u32 2, %s16
      %s19 = ssub.s32 256, 256
      %20 = vsyncadd [#allocation9], %s19
      %s21 = smul.addr %s17, 128
      %s22 = scalar_lea.hbm %s1, %s21
      %s23 = sshll.u32 [#allocation8], 4
      %s24 = int_to_ptr.vmem [resolvable:$true] %s23
      %29 = dma.hbm_to_vmem [thread:$0]  %s22, 256, %s24, [#allocation9], 128, 128, 8
    $region5: #{tpu_custom_call.1} parent=1 // pred_fallthru
      _
    // Predicated region
    $region6: #{tpu_custom_call.1} parent=1 // pred_check
      _
    $region7: #{tpu_custom_call.1} parent=1 // pred_check_branch
      %31 = sbr.rel (0) target = $region9
    $region8: #{tpu_custom_call.1} parent=1 // pred_region
      %s32 = sadd.s32 0, 0
      %p33 = scmp.lt.s32.totalorder %s32, 0
      %s34 = scalar_select %p33, %s32, 0
      %s35 = smul.u32 2, %s34
      %s37 = ssub.s32 256, 256
      %38 = vsyncadd [#allocation12], %s37
      %s39 = smul.addr %s35, 128
      %s40 = scalar_lea.hbm %s2, %s39
      %s41 = sshll.u32 [#allocation11], 4
      %s42 = int_to_ptr.vmem [resolvable:$true] %s41
      %47 = dma.hbm_to_vmem [thread:$0]  %s40, 256, %s42, [#allocation12], 128, 128, 8
    $region9: #{tpu_custom_call.1} parent=1 // pred_fallthru
      _
    // Predicated region
    $region10: #{tpu_custom_call.1} parent=1 // pred_check
      _
    $region11: #{tpu_custom_call.1} parent=1 // pred_check_branch
      %49 = sbr.rel (0) target = $region13
    $region12: #{tpu_custom_call.1} parent=1 // pred_region
      %50 = dma.done [#allocation9], 256
    $region13: #{tpu_custom_call.1} parent=1 // pred_fallthru
      _
    // Predicated region
    $region14: #{tpu_custom_call.1} parent=1 // pred_check
      _
    $region15: #{tpu_custom_call.1} parent=1 // pred_check_branch
      %52 = sbr.rel (0) target = $region17
    $region16: #{tpu_custom_call.1} parent=1 // pred_region
      %53 = dma.done [#allocation12], 256
    $region17: #{tpu_custom_call.1} parent=1 // pred_fallthru
      _
    %s54 = sadd.s32 0, 0
    %p55 = scmp.lt.s32.totalorder %s54, 0
    %s56 = scalar_select %p55, %s54, 0
    %s57 = smul.u32 2, %s56
    %s58 = sadd.s32 0, 0
    %p59 = scmp.lt.s32.totalorder %s58, 0
    %s60 = scalar_select %p59, %s58, 0
    %s61 = smul.u32 2, %s60
    %s62 = sadd.s32 0, 0
    %s63 = smul.u32 %s62, 2048
    %s64 = sld [smem:[#allocation7]]
    %p65 = scmp.eq.s32.totalorder 0, 0
    // Predicated region
    $region18: #{tpu_custom_call.1} parent=1 // pred_check
      %p66 = pneg %p65
    $region19: #{tpu_custom_call.1} parent=1 // pred_check_branch
      %68 = sbr.rel (%p66) target = $region21
    $region20: #{tpu_custom_call.1} parent=1 // pred_region
      %69 = vst [vmem:[#allocation2] sm:$0xff] 0.0
      %70 = vst [vmem:[#allocation3] sm:$0xff] 0.0
      %71 = vst [vmem:[#allocation4] sm:$0xff] 0.0
      %72 = vst [vmem:[#allocation5] sm:$0xff] 0.0
    $region21: #{tpu_custom_call.1} parent=1 // pred_fallthru
      _
    %v73 = vld [vmem:[#allocation8] sm:$0xff]
    %v74 = vld [vmem:[#allocation8 + $0x8] sm:$0xff]
    %v75 = vld [vmem:[#allocation11] sm:$0xff]
    %v76 = vld [vmem:[#allocation11 + $0x8] sm:$0xff]
    %s77 = sadd.s32 %s63, 2048
    %p78 = scmp.le.s32.totalorder %s77, %s64
    // Predicated region
    $region22: #{tpu_custom_call.1} parent=1 // pred_check
      %p79 = pneg %p78
    $region23: #{tpu_custom_call.1} parent=1 // pred_check_branch
      %81 = sbr.rel (%p79) target = $region25
    $region24: #{tpu_custom_call.1} parent=1 // pred_region
      %v82 = vxor.u32 %v73, 2147483648
      %v83 = vxor.u32 %v74, 2147483648
      %v84 = vmul.f32 %v82, 1.442695
      %v85 = vpow.pop %v84
      %v86 = vmul.f32 %v83, 1.442695
      %v87 = vpow.pop %v86
      %v88 = vadd.f32 %v85, 1.0
      %v89 = vadd.f32 %v87, 1.0
      %v90 = vrcp.pop %v88
      %v91 = vmul.f32 1.0, %v90
      %v92 = vrcp.pop %v89
      %v93 = vmul.f32 1.0, %v92
      %v94 = vlog2.pop %v91
      %v95 = vmul.f32 %v94, 0.6931472
      %v96 = vlog2.pop %v93
      %v97 = vmul.f32 %v96, 0.6931472
      %v98 = vsub.f32 %v95, %v73
      %v99 = vsub.f32 %v97, %v74
      %vm100 = vcmp.ge.f32.partialorder %v91, 1.0
      %vm101 = vcmp.ge.f32.partialorder %v93, 1.0
      %v102 = vsel %vm100, -100.0, %v98
      %v103 = vsel %vm101, -100.0, %v99
      %v104 = vsub.f32 1.0, %v91
      %v105 = vsub.f32 1.0, %v93
      %vm106 = vcmp.ge.f32.partialorder %v104, 1.0
      %vm107 = vcmp.ge.f32.partialorder %v105, 1.0
      %v108 = vsel %vm106, 0.0, %v102
      %v109 = vsel %vm107, 0.0, %v103
      %v110 = vmax.f32 %v95, -100.0
      %v111 = vmax.f32 %v97, -100.0
      %v112 = vmax.f32 %v108, -100.0
      %v113 = vmax.f32 %v109, -100.0
      %v114 = vmul.f32 %v75, %v110
      %v115 = vmul.f32 %v76, %v111
      %v116 = vsub.f32 1.0, %v75
      %v117 = vsub.f32 1.0, %v76
      %v118 = vmul.f32 %v116, %v112
      %v119 = vmul.f32 %v117, %v113
      %v120 = vadd.f32 %v114, %v118
      %v121 = vadd.f32 %v115, %v119
      %v122 = vsub.f32 0.0, %v120
      %v123 = vsub.f32 0.0, %v121
      %v124 = vld [vmem:[#allocation2] sm:$0xff]
      %v125 = vmul.f32 %v91, %v75
      %v126 = vmul.f32 %v93, %v76
      %v127 = vadd.f32 %v125, %v126
      %v128 = vadd.f32 %v124, %v127
      %129 = vst [vmem:[#allocation2] sm:$0xff] %v128
      %v130 = vld [vmem:[#allocation3] sm:$0xff]
      %v131 = vadd.f32 %v91, %v93
      %v132 = vadd.f32 %v130, %v131
      %133 = vst [vmem:[#allocation3] sm:$0xff] %v132
      %v134 = vld [vmem:[#allocation4] sm:$0xff]
      %v135 = vadd.f32 %v75, %v76
      %v136 = vadd.f32 %v134, %v135
      %137 = vst [vmem:[#allocation4] sm:$0xff] %v136
      %v138 = vld [vmem:[#allocation5] sm:$0xff]
      %v139 = vadd.f32 %v122, %v123
      %v140 = vadd.f32 %v138, %v139
      %141 = vst [vmem:[#allocation5] sm:$0xff] %v140
    $region25: #{tpu_custom_call.1} parent=1 // pred_fallthru
      _
    %p142 = scmp.gt.s32.totalorder %s77, %s64
    // Predicated region
    $region26: #{tpu_custom_call.1} parent=1 // pred_check
      %p143 = pneg %p142
    $region27: #{tpu_custom_call.1} parent=1 // pred_check_branch
      %145 = sbr.rel (%p143) target = $region29
    $region28: #{tpu_custom_call.1} parent=1 // pred_region
      %v146 = vlaneseq
      %v147 = vshrl.u32 %v146, 7
      %v148 = vadd.s32 %v147, 8
      %v149 = vlaneseq
      %v150 = vand.u32 %v149, 127
      %v151 = vmul.u32 %v147, 128
      %v152 = vmul.u32 %v148, 128
      %v153 = vstv %s63
      %v154 = vadd.s32 %v153, %v151
      %v155 = vadd.s32 %v153, %v152
      %v156 = vadd.s32 %v154, %v150
      %v157 = vadd.s32 %v155, %v150
      %v158 = vstv %s64
      %vm159 = vcmp.lt.s32.totalorder %v156, %v158
      %vm160 = vcmp.lt.s32.totalorder %v157, %v158
      %v161 = vsel %vm159, %v73, 0.0
      %v162 = vsel %vm160, %v74, 0.0
      %v163 = vsel %vm159, %v75, 0.0
      %v164 = vsel %vm160, %v76, 0.0
      %v165 = vxor.u32 %v161, 2147483648
      %v166 = vxor.u32 %v162, 2147483648
      %v167 = vmul.f32 %v165, 1.442695
      %v168 = vpow.pop %v167
      %v169 = vmul.f32 %v166, 1.442695
      %v170 = vpow.pop %v169
      %v171 = vadd.f32 %v168, 1.0
      %v172 = vadd.f32 %v170, 1.0
      %v173 = vrcp.pop %v171
      %v174 = vmul.f32 1.0, %v173
      %v175 = vrcp.pop %v172
      %v176 = vmul.f32 1.0, %v175
      %v177 = vlog2.pop %v174
      %v178 = vmul.f32 %v177, 0.6931472
      %v179 = vlog2.pop %v176
      %v180 = vmul.f32 %v179, 0.6931472
      %v181 = vsub.f32 %v178, %v161
      %v182 = vsub.f32 %v180, %v162
      %vm183 = vcmp.ge.f32.partialorder %v174, 1.0
      %vm184 = vcmp.ge.f32.partialorder %v176, 1.0
      %v185 = vsel %vm183, -100.0, %v181
      %v186 = vsel %vm184, -100.0, %v182
      %v187 = vsub.f32 1.0, %v174
      %v188 = vsub.f32 1.0, %v176
      %vm189 = vcmp.ge.f32.partialorder %v187, 1.0
      %vm190 = vcmp.ge.f32.partialorder %v188, 1.0
      %v191 = vsel %vm189, 0.0, %v185
      %v192 = vsel %vm190, 0.0, %v186
      %v193 = vmax.f32 %v178, -100.0
      %v194 = vmax.f32 %v180, -100.0
      %v195 = vmax.f32 %v191, -100.0
      %v196 = vmax.f32 %v192, -100.0
      %v197 = vmul.f32 %v163, %v193
      %v198 = vmul.f32 %v164, %v194
      %v199 = vsub.f32 1.0, %v163
      %v200 = vsub.f32 1.0, %v164
      %v201 = vmul.f32 %v199, %v195
      %v202 = vmul.f32 %v200, %v196
      %v203 = vadd.f32 %v197, %v201
      %v204 = vadd.f32 %v198, %v202
      %v205 = vsub.f32 0.0, %v203
      %v206 = vsub.f32 0.0, %v204
      %v207 = vsel %vm159, %v174, 0.0
      %v208 = vsel %vm160, %v176, 0.0
      %v209 = vsel %vm159, %v205, 0.0
      %v210 = vsel %vm160, %v206, 0.0
      %v211 = vld [vmem:[#allocation2] sm:$0xff]
      %v212 = vmul.f32 %v207, %v163
      %v213 = vmul.f32 %v208, %v164
      %v214 = vadd.f32 %v212, %v213
      %v215 = vadd.f32 %v211, %v214
      %216 = vst [vmem:[#allocation2] sm:$0xff] %v215
      %v217 = vld [vmem:[#allocation3] sm:$0xff]
      %v218 = vadd.f32 %v207, %v208
      %v219 = vadd.f32 %v217, %v218
      %220 = vst [vmem:[#allocation3] sm:$0xff] %v219
      %v221 = vld [vmem:[#allocation4] sm:$0xff]
      %v222 = vadd.f32 %v163, %v164
      %v223 = vadd.f32 %v221, %v222
      %224 = vst [vmem:[#allocation4] sm:$0xff] %v223
      %v225 = vld [vmem:[#allocation5] sm:$0xff]
      %v226 = vadd.f32 %v209, %v210
      %v227 = vadd.f32 %v225, %v226
      %228 = vst [vmem:[#allocation5] sm:$0xff] %v227
    $region29: #{tpu_custom_call.1} parent=1 // pred_fallthru
      _
    // Predicated region
    $region30: #{tpu_custom_call.1} parent=1 // pred_check
      %p229 = pneg %p65
    $region31: #{tpu_custom_call.1} parent=1 // pred_check_branch
      %231 = sbr.rel (%p229) target = $region33
    $region32: #{tpu_custom_call.1} parent=1 // pred_region
      %v232 = vld [vmem:[#allocation2] sm:$0xff]
      %v233 = vrot.slane %v232, 4
      %v234 = vadd.f32 %v232, %v233
      %v235 = vrot.slane %v234, 2
      %v236 = vadd.f32 %v234, %v235
      %v237 = vrot.slane %v236, 1
      %v238 = vadd.f32 %v236, %v237
      %239 = vst [vmem:[#allocation13] sm:$0x1] %v238
      %v240 = vld [vmem:[#allocation3] sm:$0xff]
      %v241 = vrot.slane %v240, 4
      %v242 = vadd.f32 %v240, %v241
      %v243 = vrot.slane %v242, 2
      %v244 = vadd.f32 %v242, %v243
      %v245 = vrot.slane %v244, 1
      %v246 = vadd.f32 %v244, %v245
      %247 = vst [vmem:[#allocation13 + $0x1] sm:$0x1] %v246
      %v248 = vld [vmem:[#allocation4] sm:$0xff]
      %v249 = vrot.slane %v248, 4
      %v250 = vadd.f32 %v248, %v249
      %v251 = vrot.slane %v250, 2
      %v252 = vadd.f32 %v250, %v251
      %v253 = vrot.slane %v252, 1
      %v254 = vadd.f32 %v252, %v253
      %255 = vst [vmem:[#allocation13 + $0x2] sm:$0x1] %v254
      %v256 = vld [vmem:[#allocation5] sm:$0xff]
      %v257 = vrot.slane %v256, 4
      %v258 = vadd.f32 %v256, %v257
      %v259 = vrot.slane %v258, 2
      %v260 = vadd.f32 %v258, %v259
      %v261 = vrot.slane %v260, 1
      %v262 = vadd.f32 %v260, %v261
      %263 = vst [vmem:[#allocation13 + $0x3] sm:$0x1] %v262
    $region33: #{tpu_custom_call.1} parent=1 // pred_fallthru
      _
    // Predicated region
    $region34: #{tpu_custom_call.1} parent=1 // pred_check
      _
    $region35: #{tpu_custom_call.1} parent=1 // pred_check_branch
      %265 = sbr.rel (0) target = $region37
    $region36: #{tpu_custom_call.1} parent=1 // pred_region
      %s267 = ssub.s32 64, 64
      %268 = vsyncadd [#allocation10], %s267
      %s270 = sshll.u32 [#allocation13], 4
      %s271 = int_to_ptr.vmem [resolvable:$true] %s270
      %273 = dma.vmem_to_hbm [thread:$0]  %s271, 64, %s3, [#allocation10]
    $region37: #{tpu_custom_call.1} parent=1 // pred_fallthru
      _
    // Predicated region
    $region38: #{tpu_custom_call.1} parent=1 // pred_check
      _
    $region39: #{tpu_custom_call.1} parent=1 // pred_check_branch
      %275 = sbr.rel (0) target = $region41
    $region40: #{tpu_custom_call.1} parent=1 // pred_region
      %276 = dma.done [#allocation10], 64
    $region41: #{tpu_custom_call.1} parent=1 // pred_fallthru
      _
    %277 = vsyncpa [#allocation9], 1
    %278 = vsyncpa [#allocation12], 1
    %279 = vsyncpa [#allocation10], 1

</llo_original>
